<compile_context>
chip_gen: v7x
topology: tpu7x:2x2x1
jax: 0.10.0
libtpu: 0.0.40
codegen_flags: <defaults>
</compile_context>

<pallas_src>
import functools

import jax
import jax.numpy as jnp
from jax.experimental import pallas as pl
from jax.experimental.pallas import tpu as pltpu


def _round_up(x, m):
    return (x + m - 1) // m * m


def _mlp_kernel(x_ref, w1_ref, b1_ref, w2_ref, b2_ref, o_ref, *, nr_sigmoid):
    """Fused hot path: cast -> matmul -> bias+ReLU -> matmul -> bias -> partial sigmoid."""
    # x arrives f32 straight from HBM; the bf16 cast is a free VPU op here
    # (doing it in the wrapper would cost an extra full HBM pass).
    x = x_ref[...].astype(w1_ref.dtype)                               # (TB, d_in) bf16
    # Hidden layer: bf16 x bf16 MXU matmul, f32 accumulate; bias/ReLU in f32.
    h = jnp.dot(x, w1_ref[...], preferred_element_type=jnp.float32)
    h = jnp.maximum(h + b1_ref[...], 0.0)
    # Output layer.
    h = h.astype(w2_ref.dtype)
    y = jnp.dot(h, w2_ref[...], preferred_element_type=jnp.float32) + b2_ref[...]
    # Sigmoid only on the first `nr_sigmoid` columns (mirrors the in-place
    # x[:, :nr_sigmoid_layers] = sigmoid(...) of the PyTorch forward).
    # iota/compare constant-folds; exp sits in the otherwise idle EUP slot.
    col = jax.lax.broadcasted_iota(jnp.int32, y.shape, dimension=1)
    y = jnp.where(col < nr_sigmoid, jax.nn.sigmoid(y), y)
    o_ref[...] = y.astype(o_ref.dtype)                                # bf16 slab store


def prepare_params(w1, b1, w2, b2, *, weight_dtype=jnp.bfloat16, lane=128):
    """One-time parameter prep (hoisted out of the per-call hot path).

    Weights are stored transposed w.r.t. torch (W: (in, out)) so the kernel
    computes y = x @ W + b. W2/b2 are zero-padded to a 128-wide lane-dense head.
    """
    d_in, d_hid = w1.shape
    d_out = w2.shape[1]
    d_out_pad = _round_up(d_out, lane)
    w1_q = w1.astype(weight_dtype)
    w2_q = jnp.zeros((d_hid, d_out_pad), weight_dtype).at[:, :d_out].set(
        w2.astype(weight_dtype))
    b1_f = b1.reshape(1, d_hid).astype(jnp.float32)
    b2_p = jnp.zeros((1, d_out_pad), jnp.float32).at[:, :d_out].set(
        b2.reshape(1, d_out).astype(jnp.float32))
    return (w1_q, b1_f, w2_q, b2_p, d_out)


def _pick_batch_tile(B, batch_tile):
    tb = min(batch_tile, B)
    # v7x has 2 TensorCores: keep the "parallel" grid axis >= 2 when possible
    # so both cores get work (no-op on v5e/v6e single-core chips).
    if B // tb < 2 and B >= 16 and B % 2 == 0 and (B // 2) % 8 == 0:
        tb = B // 2
    assert B % tb == 0, "batch must be a multiple of the (clamped) batch tile"
    assert tb == B or tb % 8 == 0, "batch tile must be sublane-aligned"
    return tb


def simple_mlp_forward(x, params, nr_sigmoid, *, batch_tile=4096,
                       out_dtype=jnp.bfloat16):
    """x: (B, d_in) float32; params from prepare_params().

    Returns the lane-padded (B, d_out_pad) bf16 output slab; the consumer takes
    out[:, :d_out] (fused downstream) instead of a standalone slicing pass.
    """
    w1_q, b1_f, w2_q, b2_p, _ = params
    B, d_in = x.shape
    d_hid = w1_q.shape[1]
    d_out_pad = w2_q.shape[1]

    tb = _pick_batch_tile(B, batch_tile)

    kernel = functools.partial(_mlp_kernel, nr_sigmoid=nr_sigmoid)

    # Honest advisory cost hint for XLA's scheduler around the custom call.
    cost = pl.CostEstimate(
        flops=2 * B * (d_in * d_hid + d_hid * d_out_pad),
        transcendentals=B * d_out_pad,  # sigmoid evaluated on the full padded width
        bytes_accessed=(B * d_in * x.dtype.itemsize
                        + B * d_out_pad * jnp.dtype(out_dtype).itemsize
                        + w1_q.size * w1_q.dtype.itemsize
                        + w2_q.size * w2_q.dtype.itemsize
                        + b1_f.size * 4 + b2_p.size * 4),
    )

    return pl.pallas_call(
        kernel,
        out_shape=jax.ShapeDtypeStruct((B, d_out_pad), out_dtype),
        grid_spec=pltpu.PrefetchScalarGridSpec(
            num_scalar_prefetch=0,
            grid=(B // tb,),
            in_specs=[
                pl.BlockSpec((tb, d_in), lambda i: (i, 0)),          # x (f32, streamed)
                pl.BlockSpec((d_in, d_hid), lambda i: (0, 0)),       # W1 (resident)
                pl.BlockSpec((1, d_hid), lambda i: (0, 0)),          # b1
                pl.BlockSpec((d_hid, d_out_pad), lambda i: (0, 0)),  # W2 (lane-padded)
                pl.BlockSpec((1, d_out_pad), lambda i: (0, 0)),      # b2 (lane-padded)
            ],
            out_specs=pl.BlockSpec((tb, d_out_pad), lambda i: (i, 0)),
        ),
        compiler_params=pltpu.CompilerParams(
            dimension_semantics=("parallel",)),
        cost_estimate=cost,
    )(x, w1_q, b1_f, w2_q, b2_p)


def _reference(x, w1, b1, w2, b2, nr_sigmoid):
    """Pure-JAX reference mirroring the kernel's bf16 weight/activation quantization."""
    hp = jax.lax.Precision.HIGHEST
    xq = x.astype(jnp.bfloat16).astype(jnp.float32)
    w1q = w1.astype(jnp.bfloat16).astype(jnp.float32)
    w2q = w2.astype(jnp.bfloat16).astype(jnp.float32)
    h = jnp.maximum(jnp.dot(xq, w1q, precision=hp) + b1, 0.0)
    hq = h.astype(jnp.bfloat16).astype(jnp.float32)
    y = jnp.dot(hq, w2q, precision=hp) + b2
    return y.at[:, :nr_sigmoid].set(jax.nn.sigmoid(y[:, :nr_sigmoid]))


if __name__ == "__main__":
    # Module config: SimpleMLP(input_size=64, hidden_sizes=[32, 16], reconstruction=True)
    input_size = 64
    hidden = 32
    nr_sigmoid = 16
    d_out = nr_sigmoid + input_size  # reconstruction=True => 80

    key = jax.random.PRNGKey(0)
    kx, k1, k2, k3, k4 = jax.random.split(key, 5)

    B = 256  # small demo batch; tile auto-splits to 128 so grid=2 exercises the parallel axis
    x = jax.random.normal(kx, (B, input_size), dtype=jnp.float32)

    # Deterministic param init (PyTorch-Linear-style uniform ranges).
    bound1 = 1.0 / (input_size ** 0.5)
    w1 = jax.random.uniform(k1, (input_size, hidden), jnp.float32, -bound1, bound1)
    b1 = jax.random.uniform(k2, (hidden,), jnp.float32, -bound1, bound1)
    bound2 = 1.0 / (hidden ** 0.5)
    w2 = jax.random.uniform(k3, (hidden, d_out), jnp.float32, -bound2, bound2)
    b2 = jax.random.uniform(k4, (d_out,), jnp.float32, -bound2, bound2)

    # One-time parameter prep (outside the hot path).
    params = prepare_params(w1, b1, w2, b2)

    out_pad = simple_mlp_forward(x, params, nr_sigmoid)
    out_pad = jax.block_until_ready(out_pad)

    # Consumer-side view: take the first d_out columns of the padded slab.
    out = jnp.asarray(out_pad[:, :d_out], jnp.float32)

    ref = _reference(x, w1, b1, w2, b2, nr_sigmoid)
    assert out_pad.shape == (B, 128) and out_pad.dtype == jnp.bfloat16
    assert out.shape == (B, d_out)
    # bf16 output rounding dominates the error budget (~2^-8 relative).
    assert jnp.allclose(out, ref, atol=3e-2, rtol=3e-2), float(jnp.max(jnp.abs(out - ref)))
    print("KERNEL_OK")
</pallas_src>

<mosaic_0001>
module attributes {stable_mosaic.version = 11 : i64} {
  func.func @_mlp_kernel(%arg0: i32, %arg1: memref<128x64xf32, #tpu.memory_space<vmem>>, %arg2: memref<64x32xbf16, #tpu.memory_space<vmem>>, %arg3: memref<1x32xf32, #tpu.memory_space<vmem>>, %arg4: memref<32x128xbf16, #tpu.memory_space<vmem>>, %arg5: memref<1x128xf32, #tpu.memory_space<vmem>>, %arg6: memref<128x128xbf16, #tpu.memory_space<vmem>>) attributes {dimension_semantics = [#tpu.dimension_semantics<parallel>], iteration_bounds = array<i64: 2>, scalar_prefetch = 0 : i64, scratch_operands = 0 : i64, tpu.core_type = #tpu.core_type<tc>, window_params = [{transform_indices = @transform_0, window_bounds = array<i64: 128, 64>}, {pipeline_mode = #tpu.pipeline_mode<synchronous>, transform_indices = @transform_1, window_bounds = array<i64: 64, 32>}, {pipeline_mode = #tpu.pipeline_mode<synchronous>, transform_indices = @transform_2, window_bounds = array<i64: 1, 32>}, {pipeline_mode = #tpu.pipeline_mode<synchronous>, transform_indices = @transform_3, window_bounds = array<i64: 32, 128>}, {pipeline_mode = #tpu.pipeline_mode<synchronous>, transform_indices = @transform_4, window_bounds = array<i64: 1, 128>}, {transform_indices = @transform_5, window_bounds = array<i64: 128, 128>}]} {
    %c0 = arith.constant 0 : index
    %c0_0 = arith.constant 0 : index
    %0 = vector.load %arg1[%c0, %c0_0] : memref<128x64xf32, #tpu.memory_space<vmem>>, vector<128x64xf32>
    %1 = arith.truncf %0 : vector<128x64xf32> to vector<128x64xbf16>
    %c0_1 = arith.constant 0 : index
    %c0_2 = arith.constant 0 : index
    %2 = vector.load %arg2[%c0_1, %c0_2] : memref<64x32xbf16, #tpu.memory_space<vmem>>, vector<64x32xbf16>
    %cst = arith.constant dense<0.000000e+00> : vector<128x32xf32>
    %3 = tpu.matmul %1, %2, %cst {dimension_numbers = #tpu.dot_dimension_numbers<[1], [0], [0], [1], [0, 0, 1, 1], [], []>} : vector<128x64xbf16>, vector<64x32xbf16>, vector<128x32xf32> -> vector<128x32xf32>
    %c0_3 = arith.constant 0 : index
    %c0_4 = arith.constant 0 : index
    %4 = vector.load %arg3[%c0_3, %c0_4] : memref<1x32xf32, #tpu.memory_space<vmem>>, vector<1x32xf32>
    %5 = vector.broadcast %4 : vector<1x32xf32> to vector<128x32xf32>
    %6 = arith.addf %3, %5 : vector<128x32xf32>
    %cst_5 = arith.constant 0.000000e+00 : f32
    %7 = vector.broadcast %cst_5 : f32 to vector<128x32xf32>
    %8 = arith.maximumf %6, %7 : vector<128x32xf32>
    %9 = arith.truncf %8 : vector<128x32xf32> to vector<128x32xbf16>
    %c0_6 = arith.constant 0 : index
    %c0_7 = arith.constant 0 : index
    %10 = vector.load %arg4[%c0_6, %c0_7] : memref<32x128xbf16, #tpu.memory_space<vmem>>, vector<32x128xbf16>
    %cst_8 = arith.constant dense<0.000000e+00> : vector<128x128xf32>
    %11 = tpu.matmul %9, %10, %cst_8 {dimension_numbers = #tpu.dot_dimension_numbers<[1], [0], [0], [1], [0, 0, 1, 1], [], []>} : vector<128x32xbf16>, vector<32x128xbf16>, vector<128x128xf32> -> vector<128x128xf32>
    %c0_9 = arith.constant 0 : index
    %c0_10 = arith.constant 0 : index
    %12 = vector.load %arg5[%c0_9, %c0_10] : memref<1x128xf32, #tpu.memory_space<vmem>>, vector<1x128xf32>
    %13 = vector.broadcast %12 : vector<1x128xf32> to vector<128x128xf32>
    %14 = arith.addf %11, %13 : vector<128x128xf32>
    %15 = tpu.iota {dimensions = array<i32: 1>} : vector<128x128xi32>
    %c16_i32 = arith.constant 16 : i32
    %16 = vector.broadcast %c16_i32 : i32 to vector<128x128xi32>
    %17 = arith.cmpi slt, %15, %16 : vector<128x128xi32>
    %18 = arith.negf %14 : vector<128x128xf32>
    %19 = math.exp %18 : vector<128x128xf32>
    %cst_11 = arith.constant 1.000000e+00 : f32
    %20 = vector.broadcast %cst_11 : f32 to vector<128x128xf32>
    %21 = arith.addf %20, %19 : vector<128x128xf32>
    %22 = arith.divf %20, %21 : vector<128x128xf32>
    %23 = arith.select %17, %22, %14 : vector<128x128xi1>, vector<128x128xf32>
    %24 = arith.truncf %23 : vector<128x128xf32> to vector<128x128xbf16>
    %c0_12 = arith.constant 0 : index
    %c0_13 = arith.constant 0 : index
    %25 = vector.load %arg6[%c0_12, %c0_13] : memref<128x128xbf16, #tpu.memory_space<vmem>>, vector<128x128xbf16>
    tpu.vector_store %arg6[%c0_12, %c0_13], %24 {strides = array<i32>} : memref<128x128xbf16, #tpu.memory_space<vmem>>, vector<128x128xbf16>,
    return
  }
  func.func @transform_0(%arg0: i32) -> (i32, i32) {
    %c0_i32 = arith.constant 0 : i32
    %c0_i32_0 = arith.constant 0 : i32
    return %arg0, %c0_i32 : i32, i32
  }
  func.func @transform_1(%arg0: i32) -> (i32, i32) {
    %c0_i32 = arith.constant 0 : i32
    %c0_i32_0 = arith.constant 0 : i32
    %c0_i32_1 = arith.constant 0 : i32
    return %c0_i32, %c0_i32_0 : i32, i32
  }
  func.func @transform_2(%arg0: i32) -> (i32, i32) {
    %c0_i32 = arith.constant 0 : i32
    %c0_i32_0 = arith.constant 0 : i32
    %c0_i32_1 = arith.constant 0 : i32
    return %c0_i32, %c0_i32_0 : i32, i32
  }
  func.func @transform_3(%arg0: i32) -> (i32, i32) {
    %c0_i32 = arith.constant 0 : i32
    %c0_i32_0 = arith.constant 0 : i32
    %c0_i32_1 = arith.constant 0 : i32
    return %c0_i32, %c0_i32_0 : i32, i32
  }
  func.func @transform_4(%arg0: i32) -> (i32, i32) {
    %c0_i32 = arith.constant 0 : i32
    %c0_i32_0 = arith.constant 0 : i32
    %c0_i32_1 = arith.constant 0 : i32
    return %c0_i32, %c0_i32_0 : i32, i32
  }
  func.func @transform_5(%arg0: i32) -> (i32, i32) {
    %c0_i32 = arith.constant 0 : i32
    %c0_i32_0 = arith.constant 0 : i32
    return %arg0, %c0_i32 : i32, i32
  }
}

</mosaic_0001>

<llo_original>
// kernel: tpu_custom_call.1
$region0: #{tpu_custom_call.1}
  #allocation0 [shape = 'u32[]', space=smem, size = 0x4, offset = 0x4, fixed_abs, tag = 'smem constant byte address 0x4 - core index']
  #allocation1 [shape = 'u32[144,128]{1,0:T(1,128)}', space=vmem, size = 0x12000, scoped, tag = 'internal scratch']
  %s0 = inlined_call_operand.vmem [shape: f32[256,64], index: 0, kind: input, shape index: {}]
  %s1 = inlined_call_operand.vmem [shape: bf16[64,32], index: 1, kind: input, shape index: {}]
  %s2 = inlined_call_operand.vmem [shape: f32[1,32], index: 2, kind: input, shape index: {}]
  %s3 = inlined_call_operand.vmem [shape: bf16[32,128], index: 3, kind: input, shape index: {}]
  %s4 = inlined_call_operand.vmem [shape: f32[1,128], index: 4, kind: input, shape index: {}]
  %s5 = inlined_call_operand.hbm [shape: bf16[256,128], index: 5, kind: output, shape index: {}]
  %s6 = sld [smem:[#allocation0]]
  $region53: #{tpu_custom_call.1} parent=0
    _
  %s8 = ssub.s32 1, %s6
  %s9 = scalar_select 0, %s8, %s6
  $region1: #{tpu_custom_call.1} parent=0
    #allocation2 [shape = 'u8[65536]{0}', space=vmem, size = 0x10000, scoped, tag = 'output window, operand 0']
    #allocation3 [shape = 's32[2]{0}', space=sflag, size = 0x8, scoped, tag = 'scoped memory for tpu_custom_call.1']
    %10 = vsyncpa [#allocation3], 0
    %s11 = scalar_lea.sflag [#allocation3], 1
    %12 = vsyncpa %s11, 0
    loop: start=0, step=1, limit=4
    $region2: #{tpu_custom_call.1} parent=1 // loop_pre_header
      _
    $region3: #{tpu_custom_call.1} parent=1 // loop_header
      %s14 = sphi 0, %s18
      %p15 = scmp.ge.s32.totalorder %s14, 4
      %s24 = sphi 0, %s26
      %s27 = sphi 0, %s24
      %s28 = sphi 0, %s27
      %s44 = sphi 0, %s28
      %s48 = sphi 0, %s48
      %s50 = sphi 0, %s48
      %s51 = sphi 0, %s50
      %s65 = sphi 0, %s51
      %s69 = sphi 0, %s69
      %s71 = sphi 0, %s69
      %s72 = sphi 0, %s71
      %s86 = sphi 0, %s72
      %s90 = sphi 0, %s90
      %s92 = sphi 0, %s90
      %s93 = sphi 0, %s92
      %s107 = sphi 0, %s93
      %s111 = sphi 0, %s111
      %s113 = sphi 0, %s111
      %s114 = sphi 0, %s113
      %s128 = sphi 0, %s114
      %s134 = sphi 0, %s136
      %s137 = sphi 0, %s134
      %s138 = sphi 0, %s137
      %s154 = sphi 0, %s138
    $region4: #{tpu_custom_call.1} parent=1 // loop_header_branch
      %17 = sbr.rel (%p15) target = $region8
    $region5: #{tpu_custom_call.1} parent=1 // loop_body
      %s19 = ssub.s32 %s14, 1
      %s20 = ssub.s32 %s14, 2
      %s21 = sadd.s32 %s14, 1
      %s22 = ssub.s32 %s14, %s21
      %p23 = scmp.eq.s32.totalorder %s22, 0
      %s25 = sadd.s32 %s24, 1
      %s26 = scalar_select %p23, %s24, %s25
      %p29 = pneg %p23
      %p30 = scmp.eq.s32.totalorder %s14, 1
      %p31 = por %p29, %p30
      %p32 = scmp.ne.s32.totalorder %s24, %s27
      %p33 = scmp.eq.s32.totalorder %s14, 0
      %p34 = por %p32, %p33
      %p35 = scmp.ne.s32.totalorder %s24, %s27
      %p36 = scmp.eq.s32.totalorder %s19, 1
      %p37 = por %p35, %p36
      %p38 = scmp.ne.s32.totalorder %s27, %s28
      %p39 = scmp.eq.s32.totalorder %s19, 0
      %p40 = por %p38, %p39
      %p41 = scmp.ne.s32.totalorder %s27, %s28
      %p42 = scmp.eq.s32.totalorder %s20, 1
      %p43 = por %p41, %p42
      %p45 = scmp.ne.s32.totalorder %s28, %s44
      %p46 = scmp.eq.s32.totalorder %s20, 0
      %p47 = por %p45, %p46
      %s49 = sadd.s32 %s48, 1
      %p52 = scmp.eq.s32.totalorder %s14, 1
      %p53 = scmp.ne.s32.totalorder %s48, %s50
      %p54 = scmp.eq.s32.totalorder %s14, 0
      %p55 = por %p53, %p54
      %p56 = scmp.ne.s32.totalorder %s48, %s50
      %p57 = scmp.eq.s32.totalorder %s19, 1
      %p58 = por %p56, %p57
      %p59 = scmp.ne.s32.totalorder %s50, %s51
      %p60 = scmp.eq.s32.totalorder %s19, 0
      %p61 = por %p59, %p60
      %p62 = scmp.ne.s32.totalorder %s50, %s51
      %p63 = scmp.eq.s32.totalorder %s20, 1
      %p64 = por %p62, %p63
      %p66 = scmp.ne.s32.totalorder %s51, %s65
      %p67 = scmp.eq.s32.totalorder %s20, 0
      %p68 = por %p66, %p67
      %s70 = sadd.s32 %s69, 1
      %p73 = scmp.eq.s32.totalorder %s14, 1
      %p74 = scmp.ne.s32.totalorder %s69, %s71
      %p75 = scmp.eq.s32.totalorder %s14, 0
      %p76 = por %p74, %p75
      %p77 = scmp.ne.s32.totalorder %s69, %s71
      %p78 = scmp.eq.s32.totalorder %s19, 1
      %p79 = por %p77, %p78
      %p80 = scmp.ne.s32.totalorder %s71, %s72
      %p81 = scmp.eq.s32.totalorder %s19, 0
      %p82 = por %p80, %p81
      %p83 = scmp.ne.s32.totalorder %s71, %s72
      %p84 = scmp.eq.s32.totalorder %s20, 1
      %p85 = por %p83, %p84
      %p87 = scmp.ne.s32.totalorder %s72, %s86
      %p88 = scmp.eq.s32.totalorder %s20, 0
      %p89 = por %p87, %p88
      %s91 = sadd.s32 %s90, 1
      %p94 = scmp.eq.s32.totalorder %s14, 1
      %p95 = scmp.ne.s32.totalorder %s90, %s92
      %p96 = scmp.eq.s32.totalorder %s14, 0
      %p97 = por %p95, %p96
      %p98 = scmp.ne.s32.totalorder %s90, %s92
      %p99 = scmp.eq.s32.totalorder %s19, 1
      %p100 = por %p98, %p99
      %p101 = scmp.ne.s32.totalorder %s92, %s93
      %p102 = scmp.eq.s32.totalorder %s19, 0
      %p103 = por %p101, %p102
      %p104 = scmp.ne.s32.totalorder %s92, %s93
      %p105 = scmp.eq.s32.totalorder %s20, 1
      %p106 = por %p104, %p105
      %p108 = scmp.ne.s32.totalorder %s93, %s107
      %p109 = scmp.eq.s32.totalorder %s20, 0
      %p110 = por %p108, %p109
      %s112 = sadd.s32 %s111, 1
      %p115 = scmp.eq.s32.totalorder %s14, 1
      %p116 = scmp.ne.s32.totalorder %s111, %s113
      %p117 = scmp.eq.s32.totalorder %s14, 0
      %p118 = por %p116, %p117
      %p119 = scmp.ne.s32.totalorder %s111, %s113
      %p120 = scmp.eq.s32.totalorder %s19, 1
      %p121 = por %p119, %p120
      %p122 = scmp.ne.s32.totalorder %s113, %s114
      %p123 = scmp.eq.s32.totalorder %s19, 0
      %p124 = por %p122, %p123
      %p125 = scmp.ne.s32.totalorder %s113, %s114
      %p126 = scmp.eq.s32.totalorder %s20, 1
      %p127 = por %p125, %p126
      %p129 = scmp.ne.s32.totalorder %s114, %s128
      %p130 = scmp.eq.s32.totalorder %s20, 0
      %p131 = por %p129, %p130
      %s132 = ssub.s32 %s14, %s21
      %p133 = scmp.eq.s32.totalorder %s132, 0
      %s135 = sadd.s32 %s134, 1
      %s136 = scalar_select %p133, %s134, %s135
      %p139 = pneg %p133
      %p140 = scmp.eq.s32.totalorder %s14, 1
      %p141 = por %p139, %p140
      %p142 = scmp.ne.s32.totalorder %s134, %s137
      %p143 = scmp.eq.s32.totalorder %s14, 0
      %p144 = por %p142, %p143
      %p145 = scmp.ne.s32.totalorder %s134, %s137
      %p146 = scmp.eq.s32.totalorder %s19, 1
      %p147 = por %p145, %p146
      %p148 = scmp.ne.s32.totalorder %s137, %s138
      %p149 = scmp.eq.s32.totalorder %s19, 0
      %p150 = por %p148, %p149
      %p151 = scmp.ne.s32.totalorder %s137, %s138
      %p152 = scmp.eq.s32.totalorder %s20, 1
      %p153 = por %p151, %p152
      %p155 = scmp.ne.s32.totalorder %s138, %s154
      %p156 = scmp.eq.s32.totalorder %s20, 0
      %p157 = por %p155, %p156
      %p158 = scmp.le.s32.totalorder 1, %s14
      %p159 = scmp.lt.s32.totalorder %s14, 3
      %p160 = pnand %p158, %p159
      %p161 = pneg %p160
      // Predicated region
      $region9: #{tpu_custom_call.1} parent=5 // pred_check
        _
      $region10: #{tpu_custom_call.1} parent=5 // pred_check_branch
        %163 = sbr.rel (%p160) target = $region12
      $region11: #{tpu_custom_call.1} parent=5 // pred_region
        %s164 = ssub.s32 %s14, 1
        // Predicated region
        $region13: #{tpu_custom_call.1} parent=11 // pred_check
          %p165 = pneg %p61
        $region14: #{tpu_custom_call.1} parent=11 // pred_check_branch
          %167 = sbr.rel (%p165) target = $region16
        $region15: #{tpu_custom_call.1} parent=11 // pred_region
          _
        $region16: #{tpu_custom_call.1} parent=11 // pred_fallthru
          _
        // Predicated region
        $region17: #{tpu_custom_call.1} parent=11 // pred_check
          %p168 = pneg %p82
        $region18: #{tpu_custom_call.1} parent=11 // pred_check_branch
          %170 = sbr.rel (%p168) target = $region20
        $region19: #{tpu_custom_call.1} parent=11 // pred_region
          _
        $region20: #{tpu_custom_call.1} parent=11 // pred_fallthru
          _
        // Predicated region
        $region21: #{tpu_custom_call.1} parent=11 // pred_check
          %p171 = pneg %p103
        $region22: #{tpu_custom_call.1} parent=11 // pred_check_branch
          %173 = sbr.rel (%p171) target = $region24
        $region23: #{tpu_custom_call.1} parent=11 // pred_region
          _
        $region24: #{tpu_custom_call.1} parent=11 // pred_fallthru
          _
        // Predicated region
        $region25: #{tpu_custom_call.1} parent=11 // pred_check
          %p174 = pneg %p124
        $region26: #{tpu_custom_call.1} parent=11 // pred_check_branch
          %176 = sbr.rel (%p174) target = $region28
        $region27: #{tpu_custom_call.1} parent=11 // pred_region
          _
        $region28: #{tpu_custom_call.1} parent=11 // pred_fallthru
          _
      $region12: #{tpu_custom_call.1} parent=5 // pred_fallthru
        _
      %p177 = scmp.lt.s32.totalorder %s14, 2
      // Predicated region
      $region29: #{tpu_custom_call.1} parent=5 // pred_check
        %p178 = pneg %p177
      $region30: #{tpu_custom_call.1} parent=5 // pred_check_branch
        %180 = sbr.rel (%p178) target = $region32
      $region31: #{tpu_custom_call.1} parent=5 // pred_region
        // Predicated region
        $region33: #{tpu_custom_call.1} parent=31 // pred_check
          %p181 = pneg %p34
        $region34: #{tpu_custom_call.1} parent=31 // pred_check_branch
          %183 = sbr.rel (%p181) target = $region36
        $region35: #{tpu_custom_call.1} parent=31 // pred_region
          %s184 = smul.u32 16, %s14
          %p185 = scmp.lt.s32.totalorder %s184, 31
          %s186 = scalar_select %p185, %s184, 31
          %s187 = smul.addr %s186, 8
          %s188 = scalar_lea.vmem %s0, %s187
          %s189 = smul.u32 16, %s14
        $region36: #{tpu_custom_call.1} parent=31 // pred_fallthru
          _
      $region32: #{tpu_custom_call.1} parent=5 // pred_fallthru
        _
      %p190 = scmp.le.s32.totalorder 1, %s14
      %p191 = scmp.lt.s32.totalorder %s14, 3
      %p192 = pnand %p190, %p191
      %p193 = pneg %p192
      // Predicated region
      $region37: #{tpu_custom_call.1} parent=5 // pred_check
        _
      $region38: #{tpu_custom_call.1} parent=5 // pred_check_branch
        %195 = sbr.rel (%p192) target = $region40
      $region39: #{tpu_custom_call.1} parent=5 // pred_region
        %s196 = ssub.s32 %s14, 1
        %s197 = smul.u32 16, %s19
        %p198 = scmp.lt.s32.totalorder %s197, 31
        %s199 = scalar_select %p198, %s197, 31
        %s200 = smul.addr %s199, 8
        %s201 = scalar_lea.vmem %s0, %s200
        %p202 = pneg %p40
        %p203 = pneg %p37
        %p204 = pneg %p61
        %p205 = pneg %p58
        %p206 = pneg %p82
        %p207 = pneg %p79
        %p208 = pneg %p103
        %p209 = pneg %p100
        %p210 = pneg %p124
        %p211 = pneg %p121
        %p212 = pneg %p150
        %p213 = pneg %p147
        %s214 = sand.u32 %s137, 1
        %s215 = scalar_lea.sflag [#allocation3], %s214
        %s216 = sand.u32 %s137, 1
        %s217 = smul.addr %s216, 64
        %s218 = scalar_lea.vmem [#allocation2], %s217
        %s219 = smul.u32 16, %s19
        %p220 = scmp.lt.s32.totalorder %s219, 31
        %s221 = scalar_select %p220, %s219, 31
        %s222 = smul.addr %s221, 8
        %s223 = scalar_lea.vmem %s0, %s222
        %s224 = smul.u32 16, %s19
        %s225 = smul.u32 16, %s19
        %v227 = vld [vmem:[%s223] sm:$0xff]
        %v228 = vld [vmem:[%s223 + $0x8] sm:$0xff]
        %v229 = vld [vmem:[%s223 + $0x10] sm:$0xff]
        %v230 = vld [vmem:[%s223 + $0x18] sm:$0xff]
        %v231 = vld [vmem:[%s223 + $0x20] sm:$0xff]
        %v232 = vld [vmem:[%s223 + $0x28] sm:$0xff]
        %v233 = vld [vmem:[%s223 + $0x30] sm:$0xff]
        %v234 = vld [vmem:[%s223 + $0x38] sm:$0xff]
        %v235 = vld [vmem:[%s223 + $0x40] sm:$0xff]
        %v236 = vld [vmem:[%s223 + $0x48] sm:$0xff]
        %v237 = vld [vmem:[%s223 + $0x50] sm:$0xff]
        %v238 = vld [vmem:[%s223 + $0x58] sm:$0xff]
        %v239 = vld [vmem:[%s223 + $0x60] sm:$0xff]
        %v240 = vld [vmem:[%s223 + $0x68] sm:$0xff]
        %v241 = vld [vmem:[%s223 + $0x70] sm:$0xff]
        %v242 = vld [vmem:[%s223 + $0x78] sm:$0xff]
        %v243 = vpack.c.bf16 %v228, %v227
        %v244 = vpack.c.bf16 %v230, %v229
        %v245 = vpack.c.bf16 %v232, %v231
        %v246 = vpack.c.bf16 %v234, %v233
        %v247 = vpack.c.bf16 %v236, %v235
        %v248 = vpack.c.bf16 %v238, %v237
        %v249 = vpack.c.bf16 %v240, %v239
        %v250 = vpack.c.bf16 %v242, %v241
        %v251 = vld [vmem:[%s1] sm:$0xf]
        %v252 = vld [vmem:[%s1 + $0x4] sm:$0xf]
        %v253 = vld [vmem:[%s1 + $0x8] sm:$0xf]
        %v254 = vld [vmem:[%s1 + $0xc] sm:$0xf]
        %v255 = vld [vmem:[%s1 + $0x10] sm:$0xf]
        %v256 = vld [vmem:[%s1 + $0x14] sm:$0xf]
        %v257 = vld [vmem:[%s1 + $0x18] sm:$0xf]
        %v258 = vld [vmem:[%s1 + $0x1c] sm:$0xf]
        %v259 = vld [vmem:[%s2] sm:$0x1]
        %v261 = vlaneseq
        %v262 = vshrl.u32 %v261, 7
        %v263 = vsub.s32 0, %v262
        %v264 = vrot.slane %v259, %v263
        %v274 = vunpack.c.l.b16 %v251
        %v275 = vunpack.c.l.b16 %v252
        %v276 = vunpack.c.l.b16 %v253
        %v277 = vunpack.c.l.b16 %v254
        %v278 = vunpack.c.l.b16 %v255
        %v279 = vunpack.c.l.b16 %v256
        %v280 = vunpack.c.l.b16 %v257
        %v281 = vunpack.c.l.b16 %v258
        %v282 = vpack.c.b16 %v275, %v274
        %v283 = vpack.c.b16 %v277, %v276
        %v284 = vpack.c.b16 %v279, %v278
        %v285 = vpack.c.b16 %v281, %v280
        %vm290 = vcmask 523264
        %v292 = vsel %vm290, %v243, 0
        %v295 = vsel %vm290, %v244, 0
        %v298 = vsel %vm290, %v245, 0
        %v301 = vsel %vm290, %v246, 0
        %v304 = vsel %vm290, %v247, 0
        %v307 = vsel %vm290, %v248, 0
        %v310 = vsel %vm290, %v249, 0
        %v313 = vsel %vm290, %v250, 0
        %315 = vmatprep.subr.bf16.mxu0 0
        %316 = vmatpush1.bf16.msra.mxu0 %v282
        %317 = vmatprep.subr.bf16.mxu0 0
        %318 = vmatpush1.bf16.msra.mxu0 %v283
        %319 = vmatprep.subr.bf16.mxu0 0
        %320 = vmatpush1.bf16.msra.mxu0 %v284
        %321 = vmatprep.subr.bf16.mxu0 0
        %322 = vmatpush1.bf16.msra.mxu0 %v285
        %323 = vmatprep.subr.bf16.mxu0 0
        %324 = vmatpush1.bf16.msra.mxu0 0
        %325 = vmatprep.subr.bf16.mxu0 0
        %326 = vmatpush1.bf16.msra.mxu0 0
        %327 = vmatprep.subr.bf16.mxu0 0
        %328 = vmatpush1.bf16.msra.mxu0 0
        %329 = vmatprep.subr.bf16.mxu0 0
        %330 = vmatpush1.bf16.msra.mxu0 0
        %331 = vmatprep.subr.bf16.mxu0 0
        %332 = vmatpush1.bf16.msra.mxu0 0
        %333 = vmatprep.subr.bf16.mxu0 0
        %334 = vmatpush1.bf16.msra.mxu0 0
        %335 = vmatprep.subr.bf16.mxu0 0
        %336 = vmatpush1.bf16.msra.mxu0 0
        %337 = vmatprep.subr.bf16.mxu0 0
        %338 = vmatpush1.bf16.msra.mxu0 0
        %339 = vmatprep.subr.bf16.mxu0 0
        %340 = vmatpush1.bf16.msra.mxu0 0
        %341 = vmatprep.subr.bf16.mxu0 0
        %342 = vmatpush1.bf16.msra.mxu0 0
        %343 = vmatprep.subr.bf16.mxu0 0
        %344 = vmatpush1.bf16.msra.mxu0 0
        %345 = vmatprep.subr.bf16.mxu0 0
        %346 = vmatpush1.bf16.msra.mxu0 0
        %347 = vmatprep.mubr.bf16.mxu0 0
        %348 = vmatmul.mubr.bf16.gmra.mrb[0].mxu0 %v292
        %v349 = vpop.f32.mrb[0].mxu0
        %v350 = vadd.f32 %v264, %v349
        %v351 = vpop.f32.mrb[0].mxu0
        %v352 = vpop.f32.mrb[0].mxu0
        %v353 = vadd.f32 %v264, %v352
        %v354 = vpop.f32.mrb[0].mxu0
        %355 = vmatprep.mubr.bf16.mxu0 0
        %356 = vmatmul.mubr.bf16.gmra.mrb[0].mxu0 %v295
        %v357 = vpop.f32.mrb[0].mxu0
        %v358 = vadd.f32 %v264, %v357
        %v359 = vpop.f32.mrb[0].mxu0
        %v360 = vpop.f32.mrb[0].mxu0
        %v361 = vadd.f32 %v264, %v360
        %v362 = vpop.f32.mrb[0].mxu0
        %363 = vmatprep.mubr.bf16.mxu0 0
        %364 = vmatmul.mubr.bf16.gmra.mrb[0].mxu0 %v298
        %v365 = vpop.f32.mrb[0].mxu0
        %v366 = vadd.f32 %v264, %v365
        %v367 = vpop.f32.mrb[0].mxu0
        %v368 = vpop.f32.mrb[0].mxu0
        %v369 = vadd.f32 %v264, %v368
        %v370 = vpop.f32.mrb[0].mxu0
        %371 = vmatprep.mubr.bf16.mxu0 0
        %372 = vmatmul.mubr.bf16.gmra.mrb[0].mxu0 %v301
        %v373 = vpop.f32.mrb[0].mxu0
        %v374 = vadd.f32 %v264, %v373
        %v375 = vpop.f32.mrb[0].mxu0
        %v376 = vpop.f32.mrb[0].mxu0
        %v377 = vadd.f32 %v264, %v376
        %v378 = vpop.f32.mrb[0].mxu0
        %379 = vmatprep.mubr.bf16.mxu0 0
        %380 = vmatmul.mubr.bf16.gmra.mrb[0].mxu0 %v304
        %v381 = vpop.f32.mrb[0].mxu0
        %v382 = vadd.f32 %v264, %v381
        %v383 = vpop.f32.mrb[0].mxu0
        %v384 = vpop.f32.mrb[0].mxu0
        %v385 = vadd.f32 %v264, %v384
        %v386 = vpop.f32.mrb[0].mxu0
        %387 = vmatprep.mubr.bf16.mxu0 0
        %388 = vmatmul.mubr.bf16.gmra.mrb[0].mxu0 %v307
        %v389 = vpop.f32.mrb[0].mxu0
        %v390 = vadd.f32 %v264, %v389
        %v391 = vpop.f32.mrb[0].mxu0
        %v392 = vpop.f32.mrb[0].mxu0
        %v393 = vadd.f32 %v264, %v392
        %v394 = vpop.f32.mrb[0].mxu0
        %395 = vmatprep.mubr.bf16.mxu0 0
        %396 = vmatmul.mubr.bf16.gmra.mrb[0].mxu0 %v310
        %v397 = vpop.f32.mrb[0].mxu0
        %v398 = vadd.f32 %v264, %v397
        %v399 = vpop.f32.mrb[0].mxu0
        %v400 = vpop.f32.mrb[0].mxu0
        %v401 = vadd.f32 %v264, %v400
        %v402 = vpop.f32.mrb[0].mxu0
        %403 = vmatprep.mubr.bf16.mxu0 0
        %404 = vmatmul.mubr.bf16.gmra.mrb[0].mxu0 %v313
        %v405 = vpop.f32.mrb[0].mxu0
        %v406 = vadd.f32 %v264, %v405
        %v407 = vpop.f32.mrb[0].mxu0
        %v408 = vpop.f32.mrb[0].mxu0
        %v409 = vadd.f32 %v264, %v408
        %v410 = vpop.f32.mrb[0].mxu0
        %411 = vdwg.mxu0
        %v412 = vmax.f32 %v350, 0.0
        %v413 = vmax.f32 %v353, 0.0
        %v414 = vmax.f32 %v358, 0.0
        %v415 = vmax.f32 %v361, 0.0
        %v416 = vmax.f32 %v366, 0.0
        %v417 = vmax.f32 %v369, 0.0
        %v418 = vmax.f32 %v374, 0.0
        %v419 = vmax.f32 %v377, 0.0
        %v420 = vmax.f32 %v382, 0.0
        %v421 = vmax.f32 %v385, 0.0
        %v422 = vmax.f32 %v390, 0.0
        %v423 = vmax.f32 %v393, 0.0
        %v424 = vmax.f32 %v398, 0.0
        %v425 = vmax.f32 %v401, 0.0
        %v426 = vmax.f32 %v406, 0.0
        %v427 = vmax.f32 %v409, 0.0
        %v428 = vpack.c.bf16 %v413, %v412
        %v429 = vpack.c.bf16 %v415, %v414
        %v430 = vpack.c.bf16 %v417, %v416
        %v431 = vpack.c.bf16 %v419, %v418
        %v432 = vpack.c.bf16 %v421, %v420
        %v433 = vpack.c.bf16 %v423, %v422
        %v434 = vpack.c.bf16 %v425, %v424
        %v435 = vpack.c.bf16 %v427, %v426
        %v436 = vld [vmem:[%s3] sm:$0xf]
        %v437 = vld [vmem:[%s3 + $0x4] sm:$0xf]
        %v438 = vld [vmem:[%s3 + $0x8] sm:$0xf]
        %v439 = vld [vmem:[%s3 + $0xc] sm:$0xf]
        %v440 = vld [vmem:[%s4] sm:$0x1]
        %v442 = vlaneseq
        %v443 = vshrl.u32 %v442, 7
        %v444 = vsub.s32 0, %v443
        %v445 = vrot.slane %v440, %v444
        %v451 = vunpack.c.l.b16 %v436
        %v452 = vunpack.c.l.b16 %v437
        %v453 = vunpack.c.l.b16 %v438
        %v454 = vunpack.c.l.b16 %v439
        %v455 = vpack.c.b16 %v452, %v451
        %v456 = vpack.c.b16 %v454, %v453
        %vm459 = vcmask 261120
        %v461 = vsel %vm459, %v428, 0
        %v464 = vsel %vm459, %v429, 0
        %v467 = vsel %vm459, %v430, 0
        %v470 = vsel %vm459, %v431, 0
        %v473 = vsel %vm459, %v432, 0
        %v476 = vsel %vm459, %v433, 0
        %v479 = vsel %vm459, %v434, 0
        %v482 = vsel %vm459, %v435, 0
        %484 = vmatprep.subr.bf16.mxu0 0
        %485 = vmatpush1.bf16.msra.mxu0 %v455
        %486 = vmatprep.subr.bf16.mxu0 0
        %487 = vmatpush1.bf16.msra.mxu0 %v456
        %488 = vmatprep.subr.bf16.mxu0 0
        %489 = vmatpush1.bf16.msra.mxu0 0
        %490 = vmatprep.subr.bf16.mxu0 0
        %491 = vmatpush1.bf16.msra.mxu0 0
        %492 = vmatprep.subr.bf16.mxu0 0
        %493 = vmatpush1.bf16.msra.mxu0 0
        %494 = vmatprep.subr.bf16.mxu0 0
        %495 = vmatpush1.bf16.msra.mxu0 0
        %496 = vmatprep.subr.bf16.mxu0 0
        %497 = vmatpush1.bf16.msra.mxu0 0
        %498 = vmatprep.subr.bf16.mxu0 0
        %499 = vmatpush1.bf16.msra.mxu0 0
        %500 = vmatprep.subr.bf16.mxu0 0
        %501 = vmatpush1.bf16.msra.mxu0 0
        %502 = vmatprep.subr.bf16.mxu0 0
        %503 = vmatpush1.bf16.msra.mxu0 0
        %504 = vmatprep.subr.bf16.mxu0 0
        %505 = vmatpush1.bf16.msra.mxu0 0
        %506 = vmatprep.subr.bf16.mxu0 0
        %507 = vmatpush1.bf16.msra.mxu0 0
        %508 = vmatprep.subr.bf16.mxu0 0
        %509 = vmatpush1.bf16.msra.mxu0 0
        %510 = vmatprep.subr.bf16.mxu0 0
        %511 = vmatpush1.bf16.msra.mxu0 0
        %512 = vmatprep.subr.bf16.mxu0 0
        %513 = vmatpush1.bf16.msra.mxu0 0
        %514 = vmatprep.subr.bf16.mxu0 0
        %515 = vmatpush1.bf16.msra.mxu0 0
        %516 = vmatprep.mubr.bf16.mxu0 0
        %517 = vmatmul.mubr.bf16.gmra.mrb[0].mxu0 %v461
        %v518 = vpop.f32.mrb[0].mxu0
        %v519 = vadd.f32 %v445, %v518
        %v520 = vpop.f32.mrb[0].mxu0
        %v521 = vpop.f32.mrb[0].mxu0
        %v522 = vadd.f32 %v445, %v521
        %v523 = vpop.f32.mrb[0].mxu0
        %524 = vmatprep.mubr.bf16.mxu0 0
        %525 = vmatmul.mubr.bf16.gmra.mrb[0].mxu0 %v464
        %v526 = vpop.f32.mrb[0].mxu0
        %v527 = vadd.f32 %v445, %v526
        %v528 = vpop.f32.mrb[0].mxu0
        %v529 = vpop.f32.mrb[0].mxu0
        %v530 = vadd.f32 %v445, %v529
        %v531 = vpop.f32.mrb[0].mxu0
        %532 = vmatprep.mubr.bf16.mxu0 0
        %533 = vmatmul.mubr.bf16.gmra.mrb[0].mxu0 %v467
        %v534 = vpop.f32.mrb[0].mxu0
        %v535 = vadd.f32 %v445, %v534
        %v536 = vpop.f32.mrb[0].mxu0
        %v537 = vpop.f32.mrb[0].mxu0
        %v538 = vadd.f32 %v445, %v537
        %v539 = vpop.f32.mrb[0].mxu0
        %540 = vmatprep.mubr.bf16.mxu0 0
        %541 = vmatmul.mubr.bf16.gmra.mrb[0].mxu0 %v470
        %v542 = vpop.f32.mrb[0].mxu0
        %v543 = vadd.f32 %v445, %v542
        %v544 = vpop.f32.mrb[0].mxu0
        %v545 = vpop.f32.mrb[0].mxu0
        %v546 = vadd.f32 %v445, %v545
        %v547 = vpop.f32.mrb[0].mxu0
        %548 = vmatprep.mubr.bf16.mxu0 0
        %549 = vmatmul.mubr.bf16.gmra.mrb[0].mxu0 %v473
        %v550 = vpop.f32.mrb[0].mxu0
        %v551 = vadd.f32 %v445, %v550
        %v552 = vpop.f32.mrb[0].mxu0
        %v553 = vpop.f32.mrb[0].mxu0
        %v554 = vadd.f32 %v445, %v553
        %v555 = vpop.f32.mrb[0].mxu0
        %556 = vmatprep.mubr.bf16.mxu0 0
        %557 = vmatmul.mubr.bf16.gmra.mrb[0].mxu0 %v476
        %v558 = vpop.f32.mrb[0].mxu0
        %v559 = vadd.f32 %v445, %v558
        %v560 = vpop.f32.mrb[0].mxu0
        %v561 = vpop.f32.mrb[0].mxu0
        %v562 = vadd.f32 %v445, %v561
        %v563 = vpop.f32.mrb[0].mxu0
        %564 = vmatprep.mubr.bf16.mxu0 0
        %565 = vmatmul.mubr.bf16.gmra.mrb[0].mxu0 %v479
        %v566 = vpop.f32.mrb[0].mxu0
        %v567 = vadd.f32 %v445, %v566
        %v568 = vpop.f32.mrb[0].mxu0
        %v569 = vpop.f32.mrb[0].mxu0
        %v570 = vadd.f32 %v445, %v569
        %v571 = vpop.f32.mrb[0].mxu0
        %572 = vmatprep.mubr.bf16.mxu0 0
        %573 = vmatmul.mubr.bf16.gmra.mrb[0].mxu0 %v482
        %v574 = vpop.f32.mrb[0].mxu0
        %v575 = vadd.f32 %v445, %v574
        %v576 = vpop.f32.mrb[0].mxu0
        %v577 = vpop.f32.mrb[0].mxu0
        %v578 = vadd.f32 %v445, %v577
        %v579 = vpop.f32.mrb[0].mxu0
        %580 = vdwg.mxu0
        %v581 = vlaneseq
        %v582 = vand.u32 %v581, 127
        %vm583 = vcmp.lt.s32.totalorder %v582, 16
        %v584 = vxor.u32 %v519, 2147483648
        %v585 = vxor.u32 %v522, 2147483648
        %v586 = vxor.u32 %v527, 2147483648
        %v587 = vxor.u32 %v530, 2147483648
        %v588 = vxor.u32 %v535, 2147483648
        %v589 = vxor.u32 %v538, 2147483648
        %v590 = vxor.u32 %v543, 2147483648
        %v591 = vxor.u32 %v546, 2147483648
        %v592 = vxor.u32 %v551, 2147483648
        %v593 = vxor.u32 %v554, 2147483648
        %v594 = vxor.u32 %v559, 2147483648
        %v595 = vxor.u32 %v562, 2147483648
        %v596 = vxor.u32 %v567, 2147483648
        %v597 = vxor.u32 %v570, 2147483648
        %v598 = vxor.u32 %v575, 2147483648
        %v599 = vxor.u32 %v578, 2147483648
        %v600 = vmul.f32 %v584, 1.442695
        %v601 = vpow.pop %v600
        %v602 = vmul.f32 %v585, 1.442695
        %v603 = vpow.pop %v602
        %v604 = vmul.f32 %v586, 1.442695
        %v605 = vpow.pop %v604
        %v606 = vmul.f32 %v587, 1.442695
        %v607 = vpow.pop %v606
        %v608 = vmul.f32 %v588, 1.442695
        %v609 = vpow.pop %v608
        %v610 = vmul.f32 %v589, 1.442695
        %v611 = vpow.pop %v610
        %v612 = vmul.f32 %v590, 1.442695
        %v613 = vpow.pop %v612
        %v614 = vmul.f32 %v591, 1.442695
        %v615 = vpow.pop %v614
        %v616 = vmul.f32 %v592, 1.442695
        %v617 = vpow.pop %v616
        %v618 = vmul.f32 %v593, 1.442695
        %v619 = vpow.pop %v618
        %v620 = vmul.f32 %v594, 1.442695
        %v621 = vpow.pop %v620
        %v622 = vmul.f32 %v595, 1.442695
        %v623 = vpow.pop %v622
        %v624 = vmul.f32 %v596, 1.442695
        %v625 = vpow.pop %v624
        %v626 = vmul.f32 %v597, 1.442695
        %v627 = vpow.pop %v626
        %v628 = vmul.f32 %v598, 1.442695
        %v629 = vpow.pop %v628
        %v630 = vmul.f32 %v599, 1.442695
        %v631 = vpow.pop %v630
        %v632 = vadd.f32 %v601, 1.0
        %v633 = vadd.f32 %v603, 1.0
        %v634 = vadd.f32 %v605, 1.0
        %v635 = vadd.f32 %v607, 1.0
        %v636 = vadd.f32 %v609, 1.0
        %v637 = vadd.f32 %v611, 1.0
        %v638 = vadd.f32 %v613, 1.0
        %v639 = vadd.f32 %v615, 1.0
        %v640 = vadd.f32 %v617, 1.0
        %v641 = vadd.f32 %v619, 1.0
        %v642 = vadd.f32 %v621, 1.0
        %v643 = vadd.f32 %v623, 1.0
        %v644 = vadd.f32 %v625, 1.0
        %v645 = vadd.f32 %v627, 1.0
        %v646 = vadd.f32 %v629, 1.0
        %v647 = vadd.f32 %v631, 1.0
        %v648 = vrcp.pop %v632
        %v649 = vmul.f32 1.0, %v648
        %v650 = vrcp.pop %v633
        %v651 = vmul.f32 1.0, %v650
        %v652 = vrcp.pop %v634
        %v653 = vmul.f32 1.0, %v652
        %v654 = vrcp.pop %v635
        %v655 = vmul.f32 1.0, %v654
        %v656 = vrcp.pop %v636
        %v657 = vmul.f32 1.0, %v656
        %v658 = vrcp.pop %v637
        %v659 = vmul.f32 1.0, %v658
        %v660 = vrcp.pop %v638
        %v661 = vmul.f32 1.0, %v660
        %v662 = vrcp.pop %v639
        %v663 = vmul.f32 1.0, %v662
        %v664 = vrcp.pop %v640
        %v665 = vmul.f32 1.0, %v664
        %v666 = vrcp.pop %v641
        %v667 = vmul.f32 1.0, %v666
        %v668 = vrcp.pop %v642
        %v669 = vmul.f32 1.0, %v668
        %v670 = vrcp.pop %v643
        %v671 = vmul.f32 1.0, %v670
        %v672 = vrcp.pop %v644
        %v673 = vmul.f32 1.0, %v672
        %v674 = vrcp.pop %v645
        %v675 = vmul.f32 1.0, %v674
        %v676 = vrcp.pop %v646
        %v677 = vmul.f32 1.0, %v676
        %v678 = vrcp.pop %v647
        %v679 = vmul.f32 1.0, %v678
        %v680 = vsel %vm583, %v649, %v519
        %v681 = vsel %vm583, %v651, %v522
        %v682 = vsel %vm583, %v653, %v527
        %v683 = vsel %vm583, %v655, %v530
        %v684 = vsel %vm583, %v657, %v535
        %v685 = vsel %vm583, %v659, %v538
        %v686 = vsel %vm583, %v661, %v543
        %v687 = vsel %vm583, %v663, %v546
        %v688 = vsel %vm583, %v665, %v551
        %v689 = vsel %vm583, %v667, %v554
        %v690 = vsel %vm583, %v669, %v559
        %v691 = vsel %vm583, %v671, %v562
        %v692 = vsel %vm583, %v673, %v567
        %v693 = vsel %vm583, %v675, %v570
        %v694 = vsel %vm583, %v677, %v575
        %v695 = vsel %vm583, %v679, %v578
        %v696 = vpack.c.bf16 %v681, %v680
        %v697 = vpack.c.bf16 %v683, %v682
        %v698 = vpack.c.bf16 %v685, %v684
        %v699 = vpack.c.bf16 %v687, %v686
        %v700 = vpack.c.bf16 %v689, %v688
        %v701 = vpack.c.bf16 %v691, %v690
        %v702 = vpack.c.bf16 %v693, %v692
        %v703 = vpack.c.bf16 %v695, %v694
        %v712 = vunpack.c.l.b16 %v696
        %v713 = vunpack.c.h.b16 %v696
        %v714 = vunpack.c.l.b16 %v697
        %v715 = vunpack.c.h.b16 %v697
        %v716 = vunpack.c.l.b16 %v698
        %v717 = vunpack.c.h.b16 %v698
        %v718 = vunpack.c.l.b16 %v699
        %v719 = vunpack.c.h.b16 %v699
        %v720 = vunpack.c.l.b16 %v700
        %v721 = vunpack.c.h.b16 %v700
        %v722 = vunpack.c.l.b16 %v701
        %v723 = vunpack.c.h.b16 %v701
        %v724 = vunpack.c.l.b16 %v702
        %v725 = vunpack.c.h.b16 %v702
        %v726 = vunpack.c.l.b16 %v703
        %v727 = vunpack.c.h.b16 %v703
        %v728 = vpack.c.b16 %v712, %v712
        %v729 = vpack.c.b16 %v713, %v713
        %v730 = vpack.c.b16 %v714, %v714
        %v731 = vpack.c.b16 %v715, %v715
        %v732 = vpack.c.b16 %v716, %v716
        %v733 = vpack.c.b16 %v717, %v717
        %v734 = vpack.c.b16 %v718, %v718
        %v735 = vpack.c.b16 %v719, %v719
        %v736 = vpack.c.b16 %v720, %v720
        %v737 = vpack.c.b16 %v721, %v721
        %v738 = vpack.c.b16 %v722, %v722
        %v739 = vpack.c.b16 %v723, %v723
        %v740 = vpack.c.b16 %v724, %v724
        %v741 = vpack.c.b16 %v725, %v725
        %v742 = vpack.c.b16 %v726, %v726
        %v743 = vpack.c.b16 %v727, %v727
        %760 = vst [vmem:[%s218] sm:$0xf] %v728
        %761 = vst [vmem:[%s218 + $0x4] sm:$0xf] %v729
        %762 = vst [vmem:[%s218 + $0x8] sm:$0xf] %v730
        %763 = vst [vmem:[%s218 + $0xc] sm:$0xf] %v731
        %764 = vst [vmem:[%s218 + $0x10] sm:$0xf] %v732
        %765 = vst [vmem:[%s218 + $0x14] sm:$0xf] %v733
        %766 = vst [vmem:[%s218 + $0x18] sm:$0xf] %v734
        %767 = vst [vmem:[%s218 + $0x1c] sm:$0xf] %v735
        %768 = vst [vmem:[%s218 + $0x20] sm:$0xf] %v736
        %769 = vst [vmem:[%s218 + $0x24] sm:$0xf] %v737
        %770 = vst [vmem:[%s218 + $0x28] sm:$0xf] %v738
        %771 = vst [vmem:[%s218 + $0x2c] sm:$0xf] %v739
        %772 = vst [vmem:[%s218 + $0x30] sm:$0xf] %v740
        %773 = vst [vmem:[%s218 + $0x34] sm:$0xf] %v741
        %774 = vst [vmem:[%s218 + $0x38] sm:$0xf] %v742
        %775 = vst [vmem:[%s218 + $0x3c] sm:$0xf] %v743
        %s776 = sand.u32 %s137, 1
        %s777 = scalar_lea.sflag [#allocation3], %s776
        %s778 = sand.u32 %s137, 1
        %s779 = smul.addr %s778, 64
        %s780 = scalar_lea.vmem [#allocation2], %s779
        // Predicated region
        $region41: #{tpu_custom_call.1} parent=39 // pred_check
          %p781 = pneg %p147
        $region42: #{tpu_custom_call.1} parent=39 // pred_check_branch
          %783 = sbr.rel (%p781) target = $region44
        $region43: #{tpu_custom_call.1} parent=39 // pred_region
          %s784 = smul.u32 16, %s19
          %s786 = ssub.s32 1024, 1024
          %787 = vsyncadd %s777, %s786
          %s788 = smul.addr %s784, 64
          %s789 = scalar_lea.hbm %s5, %s788
          %s790 = sshll.u32 %s780, 4
          %s791 = int_to_ptr.vmem [resolvable:$true] %s790
          %796 = dma.vmem_to_hbm [thread:$0]  %s791, 1024, %s789, %s777, 64, 64, 4
        $region44: #{tpu_custom_call.1} parent=39 // pred_fallthru
          _
      $region40: #{tpu_custom_call.1} parent=5 // pred_fallthru
        _
      %p797 = scmp.le.s32.totalorder 2, %s14
      // Predicated region
      $region45: #{tpu_custom_call.1} parent=5 // pred_check
        %p798 = pneg %p797
      $region46: #{tpu_custom_call.1} parent=5 // pred_check_branch
        %800 = sbr.rel (%p798) target = $region48
      $region47: #{tpu_custom_call.1} parent=5 // pred_region
        %s801 = ssub.s32 %s14, 2
        // Predicated region
        $region49: #{tpu_custom_call.1} parent=47 // pred_check
          %p802 = pneg %p153
        $region50: #{tpu_custom_call.1} parent=47 // pred_check_branch
          %804 = sbr.rel (%p802) target = $region52
        $region51: #{tpu_custom_call.1} parent=47 // pred_region
          %s805 = sand.u32 %s138, 1
          %s806 = scalar_lea.sflag [#allocation3], %s805
          %s807 = sand.u32 %s138, 1
          %s808 = smul.addr %s807, 64
          %s809 = scalar_lea.vmem [#allocation2], %s808
          %810 = dma.done %s806, 1024
        $region52: #{tpu_custom_call.1} parent=47 // pred_fallthru
          _
      $region48: #{tpu_custom_call.1} parent=5 // pred_fallthru
        _
    $region6: #{tpu_custom_call.1} parent=1 // loop_footer
      %s18 = sadd.s32 1, %s14
    $region7: #{tpu_custom_call.1} parent=1 // loop_footer_branch
      %13 = sbr.rel target = $region3
    $region8: #{tpu_custom_call.1} parent=1 // loop_exit
      _
    %811 = vsyncpa [#allocation3], 1
    %s812 = scalar_lea.sflag [#allocation3], 1
    %813 = vsyncpa %s812, 1

</llo_original>
